<compile_context>
chip_gen: v5e
topology: v5e:2x2
jax: 0.10.0
libtpu: 0.0.40
codegen_flags: <defaults>
</compile_context>

<pallas_src>
import jax
import jax.numpy as jnp
from jax.experimental import pallas as pl
from jax.experimental.pallas import tpu as pltpu

# --------------------------------------------------------------------------
# Model hyper-parameters (small, consistent with the PyTorch module signature)
# --------------------------------------------------------------------------
VOCAB_SIZE      = 64
EMBEDDING_DIM   = 16
NB_CATEGORY     = 8
NB_INGREDIENTS  = 24
LSTM_NB_LAYERS  = 2
LSTM_HIDDEN_DIM = 32
FC_OUT          = 32
DROPOUT_P       = 0.5        # dropout is identity at inference time
BATCH           = 2

PADDED_VOCAB    = 128        # lane-dense decoder output; sliced back to VOCAB_SIZE outside

H       = LSTM_HIDDEN_DIM
G4      = 4 * LSTM_HIDDEN_DIM          # 128 = one vreg lane width
CAT_ING = NB_CATEGORY + NB_INGREDIENTS # 32

VMEM_SPEC = pl.BlockSpec(memory_space=pltpu.MemorySpace.VMEM)
SMEM_SPEC = pl.BlockSpec(memory_space=pltpu.MemorySpace.SMEM)


# --------------------------------------------------------------------------
# In-kernel LSTM gate math (PyTorch gate order [i, f, g, o] along the 4H axis)
# --------------------------------------------------------------------------
def _lstm_gates(gates, c_prev):
    Hd = c_prev.shape[-1]
    # Full-tile transcendentals (EUP slot), then cheap 32-lane slices for the combine.
    sig = jax.nn.sigmoid(gates)
    th  = jnp.tanh(gates)
    i_g = sig[:, 0 * Hd:1 * Hd]
    f_g = sig[:, 1 * Hd:2 * Hd]
    g_g = th[:, 2 * Hd:3 * Hd]
    o_g = sig[:, 3 * Hd:4 * Hd]
    c_new = f_g * c_prev + i_g * g_g
    h_new = o_g * jnp.tanh(c_new)
    return h_new, c_new


# --------------------------------------------------------------------------
# Single fused kernel: whole forward pass
#   tok_ref   : (B,)      int32   SMEM   token ids
#   ctx_ref   : (B, 32)   f32     VMEM   [category ; ingredients]
#   state_ref : (B, 128)  f32     VMEM   [h_l0 | c_l0 | h_l1 | c_l1]   (aliased to state_out)
#   w_emb_ref : (64, 128) f32     VMEM   embedding folded into layer-0 gates (per-token row)
#   w_mm_ref  : (160,128) bf16    VMEM   [w0_ctx_h (64) | w1 (64) | head_w (32)]
#   bias_ref  : (3, 128)  f32     VMEM   [b0 | b1 | head_b]
# --------------------------------------------------------------------------
def fused_net_kernel(tok_ref, ctx_ref, state_ref, w_emb_ref, w_mm_ref, bias_ref,
                     logits_ref, state_out_ref):
    B = ctx_ref.shape[0]

    # Read the whole packed state BEFORE any (aliased) write.
    state = state_ref[...]                              # (B, 4H)
    h0_l0 = state[:, 0 * H:1 * H]
    c0_l0 = state[:, 1 * H:2 * H]
    h0_l1 = state[:, 2 * H:3 * H]
    c0_l1 = state[:, 3 * H:4 * H]

    # ---- embedding: gather the folded (emb_table @ W_ih_embed) row per token -------------
    emb_rows = jnp.concatenate(
        [w_emb_ref[pl.ds(tok_ref[b], 1), :] for b in range(B)], axis=0)   # (B, 4H) f32

    # ---- LSTM layer 0: merged matmul over [ctx ; h0_l0] (K = 64), embedding added as bias -
    xh0 = jnp.concatenate([ctx_ref[...], h0_l0], axis=1).astype(jnp.bfloat16)   # (B, 64)
    gates0 = (jnp.dot(xh0, w_mm_ref[0:64, :], preferred_element_type=jnp.float32)
              + emb_rows + bias_ref[0:1, :])
    h1, c1 = _lstm_gates(gates0, c0_l0)

    # ---- LSTM layer 1: merged matmul over [h1 ; h0_l1] (K = 64) ---------------------------
    xh1 = jnp.concatenate([h1, h0_l1], axis=1).astype(jnp.bfloat16)              # (B, 64)
    gates1 = (jnp.dot(xh1, w_mm_ref[64:128, :], preferred_element_type=jnp.float32)
              + bias_ref[1:2, :])
    h2, c2 = _lstm_gates(gates1, c0_l1)

    # ---- head: fc_inter -> dropout(identity) -> decoder folded into ONE matmul ------------
    logits_ref[...] = (jnp.dot(h2.astype(jnp.bfloat16), w_mm_ref[128:160, :],
                               preferred_element_type=jnp.float32)
                       + bias_ref[2:3, :])

    # ---- single lane-dense (128-wide) store of the packed new state -----------------------
    state_out_ref[...] = jnp.concatenate([h1, c1, h2, c2], axis=1)


# --------------------------------------------------------------------------
# Parameters: PyTorch-layout init, then packed/folded into the fused kernel layout
# --------------------------------------------------------------------------
def init_torch_params(key):
    ks = iter(jax.random.split(key, 20))
    s = 0.1
    p = {}
    p["embedding"] = s * jax.random.normal(next(ks), (VOCAB_SIZE, EMBEDDING_DIM), jnp.float32)
    in0 = EMBEDDING_DIM + NB_CATEGORY + NB_INGREDIENTS
    for l in range(LSTM_NB_LAYERS):
        in_dim = in0 if l == 0 else H
        p[f"w_ih_{l}"] = s * jax.random.normal(next(ks), (G4, in_dim), jnp.float32)
        p[f"w_hh_{l}"] = s * jax.random.normal(next(ks), (G4, H), jnp.float32)
        p[f"b_ih_{l}"] = s * jax.random.normal(next(ks), (G4,), jnp.float32)
        p[f"b_hh_{l}"] = s * jax.random.normal(next(ks), (G4,), jnp.float32)
    p["fc_w"] = s * jax.random.normal(next(ks), (FC_OUT, H), jnp.float32)
    p["fc_b"] = s * jax.random.normal(next(ks), (FC_OUT,), jnp.float32)
    p["dec_w"] = s * jax.random.normal(next(ks), (VOCAB_SIZE, FC_OUT), jnp.float32)
    p["dec_b"] = s * jax.random.normal(next(ks), (VOCAB_SIZE,), jnp.float32)
    return p


def pack_params(p):
    """Fold / transpose / pad PyTorch-layout params into the fused kernel layout."""
    # Layer 0 input feature order is torch.cat([category, ingredients, embed]) = [cat(8), ing(24), emb(16)].
    wih0_t = p["w_ih_0"].T                                         # (48, 4H)
    whh0_t = p["w_hh_0"].T                                         # (H, 4H)

    # Fold the embedding table into the layer-0 gates (gathered per token inside the kernel):
    #   embed @ W_emb == gather(emb_table @ W_emb, tok)
    w_emb = jnp.dot(p["embedding"], wih0_t[CAT_ING:, :])           # (V, 4H) f32

    w0_ctx_h = jnp.concatenate([wih0_t[:CAT_ING, :], whh0_t], axis=0)          # (64, 4H)
    w1       = jnp.concatenate([p["w_ih_1"].T, p["w_hh_1"].T], axis=0)         # (64, 4H)

    # Fold fc_inter + (identity) dropout + decoder into one head matmul (valid at eval).
    head_w = jnp.dot(p["fc_w"].T, p["dec_w"].T)                                # (H, V)
    head_b = jnp.dot(p["fc_b"], p["dec_w"].T) + p["dec_b"]                     # (V,)
    head_w_pad = jnp.zeros((H, PADDED_VOCAB), jnp.float32).at[:, :VOCAB_SIZE].set(head_w)
    head_b_pad = jnp.zeros((PADDED_VOCAB,), jnp.float32).at[:VOCAB_SIZE].set(head_b)

    # One bf16 MXU-weight slab (160, 128) and one f32 bias slab (3, 128).
    w_mm = jnp.concatenate([w0_ctx_h, w1, head_w_pad], axis=0).astype(jnp.bfloat16)   # (160, 128)
    bias = jnp.stack([p["b_ih_0"] + p["b_hh_0"],
                      p["b_ih_1"] + p["b_hh_1"],
                      head_b_pad], axis=0).astype(jnp.float32)                        # (3, 128)

    return {"w_emb": w_emb, "w_mm": w_mm, "bias": bias}


# --------------------------------------------------------------------------
# Forward pass equivalent to Net.forward
#   category:    (B, nb_category)        float32
#   ingredients: (B, nb_ingredients)     float32
#   inputs:      (B,)                    int32 token ids
#   hidden:      (h0, c0), each (num_layers, B, hidden_dim) float32
# returns (decoder_out (B, vocab_size), (h_n, c_n))
# --------------------------------------------------------------------------
def net_forward(params, category, ingredients, inputs, hidden):
    h0, c0 = hidden
    B = category.shape[0]
    tok = inputs.astype(jnp.int32).reshape(B)
    ctx = jnp.concatenate([category, ingredients], axis=1).astype(jnp.float32)      # (B, 32)
    # Pack recurrent state lane-dense: [h_l0 | c_l0 | h_l1 | c_l1]  -> (B, 128)
    state = jnp.concatenate([h0[0], c0[0], h0[1], c0[1]], axis=1).astype(jnp.float32)

    logits_pad, state_out = pl.pallas_call(
        fused_net_kernel,
        out_shape=(
            jax.ShapeDtypeStruct((B, PADDED_VOCAB), jnp.float32),
            jax.ShapeDtypeStruct((B, 4 * H), jnp.float32),
        ),
        in_specs=[SMEM_SPEC,            # tok
                  VMEM_SPEC,            # ctx
                  VMEM_SPEC,            # state (aliased)
                  VMEM_SPEC,            # w_emb
                  VMEM_SPEC,            # w_mm
                  VMEM_SPEC],           # bias
        out_specs=(VMEM_SPEC, VMEM_SPEC),
        # Update the packed hidden state in place: state (input 2) -> state_out (output 1).
        input_output_aliases={2: 1},
    )(tok, ctx, state, params["w_emb"], params["w_mm"], params["bias"])

    h_n = jnp.stack([state_out[:, 0 * H:1 * H], state_out[:, 2 * H:3 * H]], axis=0)
    c_n = jnp.stack([state_out[:, 1 * H:2 * H], state_out[:, 3 * H:4 * H]], axis=0)
    return logits_pad[:, :VOCAB_SIZE], (h_n, c_n)


def init_hidden(batch_size):
    shape = (LSTM_NB_LAYERS, batch_size, LSTM_HIDDEN_DIM)
    return (jnp.zeros(shape, jnp.float32), jnp.zeros(shape, jnp.float32))


# --------------------------------------------------------------------------
if __name__ == "__main__":
    key = jax.random.PRNGKey(0)
    k_params, k_cat, k_ing, k_tok = jax.random.split(key, 4)

    raw_params = init_torch_params(k_params)
    params = pack_params(raw_params)

    category = jax.random.normal(k_cat, (BATCH, NB_CATEGORY), jnp.float32)
    ingredients = jax.random.normal(k_ing, (BATCH, NB_INGREDIENTS), jnp.float32)
    inputs = jax.random.randint(k_tok, (BATCH,), 0, VOCAB_SIZE, jnp.int32)
    hidden = init_hidden(BATCH)

    fwd = jax.jit(net_forward)
    decoder_out, (h_n, c_n) = fwd(params, category, ingredients, inputs, hidden)
    jax.block_until_ready((decoder_out, h_n, c_n))

    assert decoder_out.shape == (BATCH, VOCAB_SIZE)
    assert h_n.shape == (LSTM_NB_LAYERS, BATCH, LSTM_HIDDEN_DIM)
    assert c_n.shape == (LSTM_NB_LAYERS, BATCH, LSTM_HIDDEN_DIM)
    assert bool(jnp.all(jnp.isfinite(decoder_out)))
    assert bool(jnp.all(jnp.isfinite(h_n))) and bool(jnp.all(jnp.isfinite(c_n)))
    print("KERNEL_OK")
</pallas_src>

<mosaic_0001>
module attributes {stable_mosaic.version = 11 : i64} {
  func.func @fused_net_kernel(%arg0: memref<2xi32, #tpu.memory_space<smem>>, %arg1: memref<2x32xf32, #tpu.memory_space<vmem>>, %arg2: memref<2x128xf32, #tpu.memory_space<vmem>>, %arg3: memref<64x128xf32, #tpu.memory_space<vmem>>, %arg4: memref<160x128xbf16, #tpu.memory_space<vmem>>, %arg5: memref<3x128xf32, #tpu.memory_space<vmem>>, %arg6: memref<2x128xf32, #tpu.memory_space<vmem>>, %arg7: memref<2x128xf32, #tpu.memory_space<vmem>>) attributes {dimension_semantics = [], scalar_prefetch = 0 : i64, scratch_operands = 0 : i64, tpu.core_type = #tpu.core_type<tc>} {
    %c0 = arith.constant 0 : index
    %c0_0 = arith.constant 0 : index
    %0 = vector.load %arg2[%c0, %c0_0] : memref<2x128xf32, #tpu.memory_space<vmem>>, vector<2x128xf32>
    %1 = vector.extract_strided_slice %0 {offsets = [0, 0], sizes = [2, 32], strides = [1, 1]} : vector<2x128xf32> to vector<2x32xf32>
    %2 = vector.extract_strided_slice %0 {offsets = [0, 32], sizes = [2, 32], strides = [1, 1]} : vector<2x128xf32> to vector<2x32xf32>
    %3 = vector.extract_strided_slice %0 {offsets = [0, 64], sizes = [2, 32], strides = [1, 1]} : vector<2x128xf32> to vector<2x32xf32>
    %4 = vector.extract_strided_slice %0 {offsets = [0, 96], sizes = [2, 32], strides = [1, 1]} : vector<2x128xf32> to vector<2x32xf32>
    %c0_1 = arith.constant 0 : index
    %5 = memref.load %arg0[%c0_1] : memref<2xi32, #tpu.memory_space<smem>>
    %6 = arith.index_cast %5 : i32 to index
    %c0_2 = arith.constant 0 : index
    %7 = vector.load %arg3[%6, %c0_2] : memref<64x128xf32, #tpu.memory_space<vmem>>, vector<1x128xf32>
    %c1 = arith.constant 1 : index
    %8 = memref.load %arg0[%c1] : memref<2xi32, #tpu.memory_space<smem>>
    %9 = arith.index_cast %8 : i32 to index
    %c0_3 = arith.constant 0 : index
    %10 = vector.load %arg3[%9, %c0_3] : memref<64x128xf32, #tpu.memory_space<vmem>>, vector<1x128xf32>
    %11 = tpu.concatenate %7, %10 in 0 : vector<1x128xf32>, vector<1x128xf32> -> vector<2x128xf32>
    %c0_4 = arith.constant 0 : index
    %c0_5 = arith.constant 0 : index
    %12 = vector.load %arg1[%c0_4, %c0_5] : memref<2x32xf32, #tpu.memory_space<vmem>>, vector<2x32xf32>
    %13 = tpu.concatenate %12, %1 in 1 : vector<2x32xf32>, vector<2x32xf32> -> vector<2x64xf32>
    %14 = arith.truncf %13 : vector<2x64xf32> to vector<2x64xbf16>
    %c0_6 = arith.constant 0 : index
    %c0_7 = arith.constant 0 : index
    %15 = vector.load %arg4[%c0_6, %c0_7] : memref<160x128xbf16, #tpu.memory_space<vmem>>, vector<64x128xbf16>
    %cst = arith.constant dense<0.000000e+00> : vector<2x128xf32>
    %16 = tpu.matmul %14, %15, %cst {dimension_numbers = #tpu.dot_dimension_numbers<[1], [0], [0], [1], [0, 0, 1, 1], [], []>} : vector<2x64xbf16>, vector<64x128xbf16>, vector<2x128xf32> -> vector<2x128xf32>
    %17 = arith.addf %16, %11 : vector<2x128xf32>
    %c0_8 = arith.constant 0 : index
    %c0_9 = arith.constant 0 : index
    %18 = vector.load %arg5[%c0_8, %c0_9] : memref<3x128xf32, #tpu.memory_space<vmem>>, vector<1x128xf32>
    %19 = vector.broadcast %18 : vector<1x128xf32> to vector<2x128xf32>
    %20 = arith.addf %17, %19 : vector<2x128xf32>
    %21 = arith.negf %20 : vector<2x128xf32>
    %22 = math.exp %21 : vector<2x128xf32>
    %cst_10 = arith.constant 1.000000e+00 : f32
    %23 = vector.broadcast %cst_10 : f32 to vector<2x128xf32>
    %24 = arith.addf %23, %22 : vector<2x128xf32>
    %25 = arith.divf %23, %24 : vector<2x128xf32>
    %26 = math.tanh %20 : vector<2x128xf32>
    %27 = vector.extract_strided_slice %25 {offsets = [0, 0], sizes = [2, 32], strides = [1, 1]} : vector<2x128xf32> to vector<2x32xf32>
    %28 = vector.extract_strided_slice %25 {offsets = [0, 32], sizes = [2, 32], strides = [1, 1]} : vector<2x128xf32> to vector<2x32xf32>
    %29 = vector.extract_strided_slice %26 {offsets = [0, 64], sizes = [2, 32], strides = [1, 1]} : vector<2x128xf32> to vector<2x32xf32>
    %30 = vector.extract_strided_slice %25 {offsets = [0, 96], sizes = [2, 32], strides = [1, 1]} : vector<2x128xf32> to vector<2x32xf32>
    %31 = arith.mulf %28, %2 : vector<2x32xf32>
    %32 = arith.mulf %27, %29 : vector<2x32xf32>
    %33 = arith.addf %31, %32 : vector<2x32xf32>
    %34 = math.tanh %33 : vector<2x32xf32>
    %35 = arith.mulf %30, %34 : vector<2x32xf32>
    %36 = tpu.concatenate %35, %3 in 1 : vector<2x32xf32>, vector<2x32xf32> -> vector<2x64xf32>
    %37 = arith.truncf %36 : vector<2x64xf32> to vector<2x64xbf16>
    %c64 = arith.constant 64 : index
    %c0_11 = arith.constant 0 : index
    %38 = vector.load %arg4[%c64, %c0_11] : memref<160x128xbf16, #tpu.memory_space<vmem>>, vector<64x128xbf16>
    %cst_12 = arith.constant dense<0.000000e+00> : vector<2x128xf32>
    %39 = tpu.matmul %37, %38, %cst_12 {dimension_numbers = #tpu.dot_dimension_numbers<[1], [0], [0], [1], [0, 0, 1, 1], [], []>} : vector<2x64xbf16>, vector<64x128xbf16>, vector<2x128xf32> -> vector<2x128xf32>
    %c1_13 = arith.constant 1 : index
    %c0_14 = arith.constant 0 : index
    %40 = vector.load %arg5[%c1_13, %c0_14] : memref<3x128xf32, #tpu.memory_space<vmem>>, vector<1x128xf32>
    %41 = vector.broadcast %40 : vector<1x128xf32> to vector<2x128xf32>
    %42 = arith.addf %39, %41 : vector<2x128xf32>
    %43 = arith.negf %42 : vector<2x128xf32>
    %44 = math.exp %43 : vector<2x128xf32>
    %cst_15 = arith.constant 1.000000e+00 : f32
    %45 = vector.broadcast %cst_15 : f32 to vector<2x128xf32>
    %46 = arith.addf %45, %44 : vector<2x128xf32>
    %47 = arith.divf %45, %46 : vector<2x128xf32>
    %48 = math.tanh %42 : vector<2x128xf32>
    %49 = vector.extract_strided_slice %47 {offsets = [0, 0], sizes = [2, 32], strides = [1, 1]} : vector<2x128xf32> to vector<2x32xf32>
    %50 = vector.extract_strided_slice %47 {offsets = [0, 32], sizes = [2, 32], strides = [1, 1]} : vector<2x128xf32> to vector<2x32xf32>
    %51 = vector.extract_strided_slice %48 {offsets = [0, 64], sizes = [2, 32], strides = [1, 1]} : vector<2x128xf32> to vector<2x32xf32>
    %52 = vector.extract_strided_slice %47 {offsets = [0, 96], sizes = [2, 32], strides = [1, 1]} : vector<2x128xf32> to vector<2x32xf32>
    %53 = arith.mulf %50, %4 : vector<2x32xf32>
    %54 = arith.mulf %49, %51 : vector<2x32xf32>
    %55 = arith.addf %53, %54 : vector<2x32xf32>
    %56 = math.tanh %55 : vector<2x32xf32>
    %57 = arith.mulf %52, %56 : vector<2x32xf32>
    %58 = arith.truncf %57 : vector<2x32xf32> to vector<2x32xbf16>
    %c128 = arith.constant 128 : index
    %c0_16 = arith.constant 0 : index
    %59 = vector.load %arg4[%c128, %c0_16] : memref<160x128xbf16, #tpu.memory_space<vmem>>, vector<32x128xbf16>
    %cst_17 = arith.constant dense<0.000000e+00> : vector<2x128xf32>
    %60 = tpu.matmul %58, %59, %cst_17 {dimension_numbers = #tpu.dot_dimension_numbers<[1], [0], [0], [1], [0, 0, 1, 1], [], []>} : vector<2x32xbf16>, vector<32x128xbf16>, vector<2x128xf32> -> vector<2x128xf32>
    %c2 = arith.constant 2 : index
    %c0_18 = arith.constant 0 : index
    %61 = vector.load %arg5[%c2, %c0_18] : memref<3x128xf32, #tpu.memory_space<vmem>>, vector<1x128xf32>
    %62 = vector.broadcast %61 : vector<1x128xf32> to vector<2x128xf32>
    %63 = arith.addf %60, %62 : vector<2x128xf32>
    %c0_19 = arith.constant 0 : index
    %c0_20 = arith.constant 0 : index
    %64 = vector.load %arg6[%c0_19, %c0_20] : memref<2x128xf32, #tpu.memory_space<vmem>>, vector<2x128xf32>
    tpu.vector_store %arg6[%c0_19, %c0_20], %63 {strides = array<i32>} : memref<2x128xf32, #tpu.memory_space<vmem>>, vector<2x128xf32>,
    %65 = tpu.concatenate %35, %33, %57, %55 in 1 : vector<2x32xf32>, vector<2x32xf32>, vector<2x32xf32>, vector<2x32xf32> -> vector<2x128xf32>
    %c0_21 = arith.constant 0 : index
    %c0_22 = arith.constant 0 : index
    %66 = vector.load %arg7[%c0_21, %c0_22] : memref<2x128xf32, #tpu.memory_space<vmem>>, vector<2x128xf32>
    tpu.vector_store %arg7[%c0_21, %c0_22], %65 {strides = array<i32>} : memref<2x128xf32, #tpu.memory_space<vmem>>, vector<2x128xf32>,
    return
  }
}

</mosaic_0001>

<llo_original>
// kernel: net_forward.1
$region0: #{net_forward.1}
  #allocation0 [shape = 'u32[]', space=smem, size = 0x4, offset = 0x4, fixed_abs, tag = 'smem constant byte address 0x4 - core index']
  #allocation1 [shape = 'u32[72,128]{1,0:T(1,128)}', space=vmem, size = 0x9000, scoped, tag = 'internal scratch']
  %s0 = inlined_call_operand.vmem [shape: s32[2], index: 0, kind: input, shape index: {}]
  %s1 = inlined_call_operand.vmem [shape: f32[2,32], index: 1, kind: input, shape index: {}]
  %s2 = inlined_call_operand.vmem [shape: f32[2,128], index: 2, kind: input, shape index: {}, may-alias: {2,7}]
  %s3 = inlined_call_operand.hbm [shape: f32[64,128], index: 3, kind: input, shape index: {}]
  %s4 = inlined_call_operand.hbm [shape: bf16[160,128], index: 4, kind: input, shape index: {}]
  %s5 = inlined_call_operand.vmem [shape: f32[3,128], index: 5, kind: input, shape index: {}]
  %s6 = inlined_call_operand.hbm [shape: f32[2,128], index: 6, kind: output, shape index: {0}]
  %s7 = inlined_call_operand.vmem [shape: f32[2,128], index: 7, kind: output, shape index: {1}, may-alias: {2,7}]
  %8 = xla_tuple %s6, %s7
  %s9 = sld [smem:[#allocation0]]
  $region54: #{net_forward.1} parent=0
    _
  %s11 = ssub.s32 1, %s9
  %s12 = scalar_select 0, %s11, %s9
  $region1: #{net_forward.1} parent=0
    #allocation2 [shape = 'u8[512]{0}', space=smem, size = 0x200, scoped, tag = 'input window, operand 0, single buffered']
    #allocation3 [shape = 's32[1]{0}', space=sflag, size = 0x4, scoped, tag = 'scoped memory for net_forward.1']
    #allocation4 [shape = 's32[1]{0}', space=sflag, size = 0x4, scoped, tag = 'scoped memory for net_forward.1']
    #allocation5 [shape = 's32[1]{0}', space=sflag, size = 0x4, scoped, tag = 'scoped memory for net_forward.1']
    #allocation6 [shape = 'u8[32768]{0}', space=vmem, size = 0x8000, scoped, tag = 'input window, operand 3, single buffered']
    #allocation7 [shape = 'u8[40960]{0}', space=vmem, size = 0xa000, scoped, tag = 'input window, operand 4, single buffered']
    #allocation8 [shape = 's32[1]{0}', space=sflag, size = 0x4, scoped, tag = 'scoped memory for net_forward.1']
    #allocation9 [shape = 'u8[1024]{0}', space=vmem, size = 0x400, scoped, tag = 'output window, operand 0, single buffered']
    %13 = vsyncpa [#allocation5], 0
    %14 = vsyncpa [#allocation3], 0
    %15 = vsyncpa [#allocation8], 0
    %16 = vsyncpa [#allocation4], 0
    // Predicated region
    $region2: #{net_forward.1} parent=1 // pred_check
      _
    $region3: #{net_forward.1} parent=1 // pred_check_branch
      %18 = sbr.rel (0) target = $region5
    $region4: #{net_forward.1} parent=1 // pred_region
      %20 = vsyncadd [#allocation5], 0
      %s22 = sshll.u32 %s0, 4
      %s23 = int_to_ptr.vmem [resolvable:$true] %s22
      %25 = dma.vmem_to_smem %s23, 16, [#allocation2], [#allocation5]
    $region5: #{net_forward.1} parent=1 // pred_fallthru
      _
    // Predicated region
    $region6: #{net_forward.1} parent=1 // pred_check
      _
    $region7: #{net_forward.1} parent=1 // pred_check_branch
      %27 = sbr.rel (0) target = $region9
    $region8: #{net_forward.1} parent=1 // pred_region
      _
    $region9: #{net_forward.1} parent=1 // pred_fallthru
      _
    // Predicated region
    $region10: #{net_forward.1} parent=1 // pred_check
      _
    $region11: #{net_forward.1} parent=1 // pred_check_branch
      %29 = sbr.rel (0) target = $region13
    $region12: #{net_forward.1} parent=1 // pred_region
      _
    $region13: #{net_forward.1} parent=1 // pred_fallthru
      _
    // Predicated region
    $region14: #{net_forward.1} parent=1 // pred_check
      _
    $region15: #{net_forward.1} parent=1 // pred_check_branch
      %31 = sbr.rel (0) target = $region17
    $region16: #{net_forward.1} parent=1 // pred_region
      %33 = vsyncadd [#allocation3], 0
      %s34 = sshll.u32 %s3, 4
      %s35 = int_to_ptr.hbm [resolvable:$true] %s34
      %s36 = sshll.u32 [#allocation6], 4
      %s37 = int_to_ptr.vmem [resolvable:$true] %s36
      %42 = dma.hbm_to_vmem [thread:$0]  %s35, 1024, %s37, [#allocation3], 128, 128, 8
    $region17: #{net_forward.1} parent=1 // pred_fallthru
      _
    // Predicated region
    $region18: #{net_forward.1} parent=1 // pred_check
      _
    $region19: #{net_forward.1} parent=1 // pred_check_branch
      %44 = sbr.rel (0) target = $region21
    $region20: #{net_forward.1} parent=1 // pred_region
      %46 = vsyncadd [#allocation8], 0
      %s47 = sshll.u32 %s4, 4
      %s48 = int_to_ptr.hbm [resolvable:$true] %s47
      %s49 = sshll.u32 [#allocation7], 4
      %s50 = int_to_ptr.vmem [resolvable:$true] %s49
      %55 = dma.hbm_to_vmem [thread:$0]  %s48, 1280, %s50, [#allocation8], 64, 64, 4
    $region21: #{net_forward.1} parent=1 // pred_fallthru
      _
    // Predicated region
    $region22: #{net_forward.1} parent=1 // pred_check
      _
    $region23: #{net_forward.1} parent=1 // pred_check_branch
      %57 = sbr.rel (0) target = $region25
    $region24: #{net_forward.1} parent=1 // pred_region
      _
    $region25: #{net_forward.1} parent=1 // pred_fallthru
      _
    // Predicated region
    $region26: #{net_forward.1} parent=1 // pred_check
      _
    $region27: #{net_forward.1} parent=1 // pred_check_branch
      %59 = sbr.rel (0) target = $region29
    $region28: #{net_forward.1} parent=1 // pred_region
      %61 = dma.done [#allocation5], 16
    $region29: #{net_forward.1} parent=1 // pred_fallthru
      _
    // Predicated region
    $region30: #{net_forward.1} parent=1 // pred_check
      _
    $region31: #{net_forward.1} parent=1 // pred_check_branch
      %63 = sbr.rel (0) target = $region33
    $region32: #{net_forward.1} parent=1 // pred_region
      %65 = dma.done [#allocation3], 1024
    $region33: #{net_forward.1} parent=1 // pred_fallthru
      _
    // Predicated region
    $region34: #{net_forward.1} parent=1 // pred_check
      _
    $region35: #{net_forward.1} parent=1 // pred_check_branch
      %67 = sbr.rel (0) target = $region37
    $region36: #{net_forward.1} parent=1 // pred_region
      %69 = dma.done [#allocation8], 1280
    $region37: #{net_forward.1} parent=1 // pred_fallthru
      _
    %70 = sfence
    %v72 = vld [vmem:[%s2] sm:$0x3]
    %s73 = sld [smem:[#allocation2]]
    %s74 = scalar_lea.vmem [#allocation6], %s73
    %v75 = vld [vmem:[%s74] sm:$0x1]
    %s76 = sld [smem:[#allocation2 + $0x1]]
    %s77 = scalar_lea.vmem [#allocation6], %s76
    %v78 = vld [vmem:[%s77] sm:$0x1]
    %v80 = vrot.slane %v78, 7
    %vm82 = vcmask 1040384
    %v83 = vsel %vm82, %v75, %v80
    %v84 = vld [vmem:[%s1] sm:$0x3]
    %86 = vrot.lane.b32.xlu0 %v72, 32
    %v87 = vpop.permute.xlu0 %86
    %vm89 = vcmask 261120
    %v90 = vsel %vm89, %v84, %v87
    %v91 = vpack.c.bf16 %v90, %v90
    %v92 = vld [vmem:[#allocation7] sm:$0xf]
    %v93 = vld [vmem:[#allocation7 + $0x4] sm:$0xf]
    %v94 = vld [vmem:[#allocation7 + $0x8] sm:$0xf]
    %v95 = vld [vmem:[#allocation7 + $0xc] sm:$0xf]
    %v96 = vld [vmem:[#allocation7 + $0x10] sm:$0xf]
    %v97 = vld [vmem:[#allocation7 + $0x14] sm:$0xf]
    %v98 = vld [vmem:[#allocation7 + $0x18] sm:$0xf]
    %v99 = vld [vmem:[#allocation7 + $0x1c] sm:$0xf]
    %v108 = vunpack.c.l.b16 %v92
    %v109 = vunpack.c.l.b16 %v93
    %v110 = vunpack.c.l.b16 %v94
    %v111 = vunpack.c.l.b16 %v95
    %v112 = vunpack.c.l.b16 %v96
    %v113 = vunpack.c.l.b16 %v97
    %v114 = vunpack.c.l.b16 %v98
    %v115 = vunpack.c.l.b16 %v99
    %v116 = vpack.c.b16 %v109, %v108
    %v117 = vpack.c.b16 %v111, %v110
    %v118 = vpack.c.b16 %v113, %v112
    %v119 = vpack.c.b16 %v115, %v114
    %vm124 = vcmask 523264
    %v126 = vsel %vm124, %v91, 0
    %128 = vmatpush.bf16.msra.mxu0 0
    %129 = vmatpush.bf16.msra.mxu0 0
    %130 = vmatpush.bf16.msra.mxu0 0
    %131 = vmatpush.bf16.msra.mxu0 0
    %132 = vmatpush.bf16.msra.mxu0 %v119
    %133 = vmatpush.bf16.msra.mxu0 %v118
    %134 = vmatpush.bf16.msra.mxu0 %v117
    %135 = vmatpush.bf16.msra.mxu0 %v116
    %136 = vmatmul.bf16.gmra.mxu0 %v126
    %v137 = vpop.f32.mrf.mxu0
    %v138 = vadd.f32 %v83, %v137
    %v139 = vpop.f32.mrf.mxu0
    %140 = vdwg.mxu0
    %v141 = vld [vmem:[%s5] sm:$0x1]
    %v142 = vperm.slane %v141, 0
    %v143 = vadd.f32 %v138, %v142
    %v144 = vxor.u32 %v143, 2147483648
    %v145 = vmul.f32 %v144, 1.442695
    %v146 = vpow.pop %v145
    %v147 = vadd.f32 %v146, 1.0
    %v148 = vrcp.pop %v147
    %v149 = vmul.f32 %v147, %v148
    %v150 = vsub.f32 1.0, %v149
    %v151 = vmul.f32 %v148, %v150
    %v152 = vadd.f32 %v148, %v151
    %vm153 = vweird.f32 %v147
    %vm154 = vweird.f32 %v148
    %vm155 = vmor %vm153, %vm154
    %v156 = vsel %vm155, %v148, %v152
    %v157 = vand.u32 2147483647, %v147
    %vm158 = vcmp.eq.f32.partialorder %v157, 8.507059e+37
    %v159 = vand.u32 %v147, 2147483648
    %v160 = vor.u32 1.1754944e-38, %v159
    %v161 = vsel %vm158, %v160, %v156
    %v162 = vmul.f32 1.0, %v161
    %v163 = vtanh.pop %v143
    %v164 = vmul.f32 %v162, %v72
    %166 = vrot.lane.b32.xlu0 %v163, 64
    %v167 = vpop.permute.xlu0 %166
    %v169 = vmul.f32 %v162, %v167
    %171 = vrot.lane.b32.xlu0 %v169, 32
    %v172 = vpop.permute.xlu0 %171
    %v174 = vadd.f32 %v164, %v172
    %v175 = vtanh.pop %v174
    %177 = vrot.lane.b32.xlu0 %v175, 64
    %v178 = vpop.permute.xlu0 %177
    %v180 = vmul.f32 %v162, %v178
    %182 = vrot.lane.b32.xlu0 %v180, 32
    %v183 = vpop.permute.xlu0 %182
    %185 = vrot.lane.b32.xlu0 %v72, 96
    %v186 = vpop.permute.xlu0 %185
    %v188 = vsel %vm89, %v183, %v186
    %v189 = vpack.c.bf16 %v188, %v188
    %v190 = vld [vmem:[#allocation7 + $0x20] sm:$0xf]
    %v191 = vld [vmem:[#allocation7 + $0x24] sm:$0xf]
    %v192 = vld [vmem:[#allocation7 + $0x28] sm:$0xf]
    %v193 = vld [vmem:[#allocation7 + $0x2c] sm:$0xf]
    %v194 = vld [vmem:[#allocation7 + $0x30] sm:$0xf]
    %v195 = vld [vmem:[#allocation7 + $0x34] sm:$0xf]
    %v196 = vld [vmem:[#allocation7 + $0x38] sm:$0xf]
    %v197 = vld [vmem:[#allocation7 + $0x3c] sm:$0xf]
    %v198 = vld [vmem:[%s5 + $0x1] sm:$0x1]
    %v199 = vperm.slane %v198, 0
    %v208 = vunpack.c.l.b16 %v190
    %v209 = vunpack.c.l.b16 %v191
    %v210 = vunpack.c.l.b16 %v192
    %v211 = vunpack.c.l.b16 %v193
    %v212 = vunpack.c.l.b16 %v194
    %v213 = vunpack.c.l.b16 %v195
    %v214 = vunpack.c.l.b16 %v196
    %v215 = vunpack.c.l.b16 %v197
    %v216 = vpack.c.b16 %v209, %v208
    %v217 = vpack.c.b16 %v211, %v210
    %v218 = vpack.c.b16 %v213, %v212
    %v219 = vpack.c.b16 %v215, %v214
    %v225 = vsel %vm124, %v189, 0
    %227 = vmatpush.bf16.msra.mxu0 0
    %228 = vmatpush.bf16.msra.mxu0 0
    %229 = vmatpush.bf16.msra.mxu0 0
    %230 = vmatpush.bf16.msra.mxu0 0
    %231 = vmatpush.bf16.msra.mxu0 %v219
    %232 = vmatpush.bf16.msra.mxu0 %v218
    %233 = vmatpush.bf16.msra.mxu0 %v217
    %234 = vmatpush.bf16.msra.mxu0 %v216
    %235 = vmatmul.bf16.gmra.mxu0 %v225
    %v236 = vpop.f32.mrf.mxu0
    %v237 = vadd.f32 %v199, %v236
    %v238 = vpop.f32.mrf.mxu0
    %239 = vdwg.mxu0
    %v240 = vxor.u32 %v237, 2147483648
    %v241 = vmul.f32 %v240, 1.442695
    %v242 = vpow.pop %v241
    %v243 = vadd.f32 %v242, 1.0
    %v244 = vrcp.pop %v243
    %v245 = vmul.f32 %v243, %v244
    %v246 = vsub.f32 1.0, %v245
    %v247 = vmul.f32 %v244, %v246
    %v248 = vadd.f32 %v244, %v247
    %vm249 = vweird.f32 %v243
    %vm250 = vweird.f32 %v244
    %vm251 = vmor %vm249, %vm250
    %v252 = vsel %vm251, %v244, %v248
    %v253 = vand.u32 2147483647, %v243
    %vm254 = vcmp.eq.f32.partialorder %v253, 8.507059e+37
    %v255 = vand.u32 %v243, 2147483648
    %v256 = vor.u32 1.1754944e-38, %v255
    %v257 = vsel %vm254, %v256, %v252
    %v258 = vmul.f32 1.0, %v257
    %v259 = vtanh.pop %v237
    %260 = vrot.lane.b32.xlu0 %v72, 64
    %v261 = vpop.permute.xlu0 %260
    %v263 = vmul.f32 %v258, %v261
    %265 = vrot.lane.b32.xlu0 %v259, 64
    %v266 = vpop.permute.xlu0 %265
    %v268 = vmul.f32 %v258, %v266
    %270 = vrot.lane.b32.xlu0 %v268, 32
    %v271 = vpop.permute.xlu0 %270
    %v273 = vadd.f32 %v263, %v271
    %v274 = vtanh.pop %v273
    %276 = vrot.lane.b32.xlu0 %v274, 64
    %v277 = vpop.permute.xlu0 %276
    %v279 = vmul.f32 %v258, %v277
    %v280 = vpack.c.bf16 %v279, %v279
    %v281 = vld [vmem:[#allocation7 + $0x40] sm:$0xf]
    %v282 = vld [vmem:[#allocation7 + $0x44] sm:$0xf]
    %v283 = vld [vmem:[#allocation7 + $0x48] sm:$0xf]
    %v284 = vld [vmem:[#allocation7 + $0x4c] sm:$0xf]
    %v285 = vld [vmem:[%s5 + $0x2] sm:$0x1]
    %v286 = vperm.slane %v285, 0
    %288 = vrot.lane.b32.xlu0 %v280, 32
    %v289 = vpop.permute.xlu0 %288
    %v294 = vunpack.c.l.b16 %v281
    %v295 = vunpack.c.l.b16 %v282
    %v296 = vunpack.c.l.b16 %v283
    %v297 = vunpack.c.l.b16 %v284
    %v298 = vpack.c.b16 %v295, %v294
    %v299 = vpack.c.b16 %v297, %v296
    %v303 = vsel %vm89, %v289, 0
    %305 = vmatpush.bf16.msra.mxu0 0
    %306 = vmatpush.bf16.msra.mxu0 0
    %307 = vmatpush.bf16.msra.mxu0 0
    %308 = vmatpush.bf16.msra.mxu0 0
    %309 = vmatpush.bf16.msra.mxu0 0
    %310 = vmatpush.bf16.msra.mxu0 0
    %311 = vmatpush.bf16.msra.mxu0 %v299
    %312 = vmatpush.bf16.msra.mxu0 %v298
    %313 = vmatmul.bf16.gmra.mxu0 %v303
    %v314 = vpop.f32.mrf.mxu0
    %v315 = vadd.f32 %v286, %v314
    %v316 = vpop.f32.mrf.mxu0
    %317 = vdwg.mxu0
    %318 = vst [vmem:[#allocation9] sm:$0x3] %v315
    %320 = vrot.lane.b32.xlu0 %v279, 96
    %v321 = vpop.permute.xlu0 %320
    %324 = vrot.lane.b32.xlu0 %v273, 64
    %v325 = vpop.permute.xlu0 %324
    %v327 = vsel %vm89, %v183, %v174
    %v328 = vsel %vm124, %v327, %v321
    %vm329 = vcmask 785408
    %v330 = vsel %vm329, %v328, %v325
    %331 = vst [vmem:[%s7] sm:$0x3] %v330
    // Predicated region
    $region38: #{net_forward.1} parent=1 // pred_check
      _
    $region39: #{net_forward.1} parent=1 // pred_check_branch
      %333 = sbr.rel (0) target = $region41
    $region40: #{net_forward.1} parent=1 // pred_region
      %335 = vsyncadd [#allocation4], 0
      %s337 = sshll.u32 [#allocation9], 4
      %s338 = int_to_ptr.vmem [resolvable:$true] %s337
      %s339 = sshll.u32 %s6, 4
      %s340 = int_to_ptr.hbm [resolvable:$true] %s339
      %342 = dma.vmem_to_hbm [thread:$0]  %s338, 32, %s340, [#allocation4]
    $region41: #{net_forward.1} parent=1 // pred_fallthru
      _
    // Predicated region
    $region42: #{net_forward.1} parent=1 // pred_check
      _
    $region43: #{net_forward.1} parent=1 // pred_check_branch
      %344 = sbr.rel (0) target = $region45
    $region44: #{net_forward.1} parent=1 // pred_region
      _
    $region45: #{net_forward.1} parent=1 // pred_fallthru
      _
    // Predicated region
    $region46: #{net_forward.1} parent=1 // pred_check
      _
    $region47: #{net_forward.1} parent=1 // pred_check_branch
      %346 = sbr.rel (0) target = $region49
    $region48: #{net_forward.1} parent=1 // pred_region
      %348 = dma.done [#allocation4], 32
    $region49: #{net_forward.1} parent=1 // pred_fallthru
      _
    // Predicated region
    $region50: #{net_forward.1} parent=1 // pred_check
      _
    $region51: #{net_forward.1} parent=1 // pred_check_branch
      %350 = sbr.rel (0) target = $region53
    $region52: #{net_forward.1} parent=1 // pred_region
      _
    $region53: #{net_forward.1} parent=1 // pred_fallthru
      _
    %351 = vsyncpa [#allocation3], 1
    %352 = vsyncpa [#allocation8], 1
    %353 = vsyncpa [#allocation4], 1
    %354 = vsyncpa [#allocation5], 1

</llo_original>
